<compile_context>
chip_gen: v7x
topology: tpu7x:2x2x1
jax: 0.10.0
libtpu: 0.0.40
codegen_flags: <defaults>
</compile_context>

<pallas_src>
import functools

import jax
import jax.numpy as jnp
from jax.experimental import pallas as pl
from jax.experimental.pallas import tpu as pltpu


def _conv1x1_kernel(x_ref, w_ref, b_ref, o_ref, *, n_in, n_out):
    """One (C, TS) activation tile -> (O, TS) output tile.

    x_ref: (C, TS) VMEM          w_ref: (O*C,) SMEM f32 scalars
    b_ref: (O,)    SMEM f32      o_ref: (O, TS) VMEM
    """
    x = x_ref[...].astype(jnp.float32)            # (C, TS), loaded once, reused O times
    for o in range(n_out):                        # O, C are tiny -> full unroll on VPU
        acc = x[0:1, :] * w_ref[o * n_in + 0]     # (1, TS) broadcast-FMA chain
        for c in range(1, n_in):
            acc = acc + x[c:c + 1, :] * w_ref[o * n_in + c]
        o_ref[pl.ds(o, 1), :] = (acc + b_ref[o]).astype(o_ref.dtype)


def _choose_spatial_tile(S, C, O, itemsize=4, max_tile=16384,
                         vmem_budget=16 * 1024 * 1024):
    """Pick a lane-dense spatial tile.

    Full S if it fits in one block; otherwise the largest multiple-of-128
    divisor of S under a VMEM-aware cap; otherwise a capped tile with a ragged
    (Pallas-masked) tail block.
    """
    # Double-buffered input (C rows) + output (O rows), f32 accumulation copy.
    per_lane_bytes = (C + O) * itemsize * 2
    cap = min(max_tile, vmem_budget // max(per_lane_bytes, 1))
    cap -= cap % 128
    cap = max(cap, 128)

    if S <= cap:
        return S, 1                               # single full block (always legal)
    for ts in range(cap, 127, -128):
        if S % ts == 0:
            return ts, S // ts                    # exact multiple-of-128 divisor
    # No multiple-of-128 divisor: ragged last block (masked stores, lane-local
    # compute -> correct).
    return cap, pl.cdiv(S, cap)


@jax.jit
def outconv_forward(x, weight, bias):
    """Forward of outconv.

    x:      (N, C, D, H, W) float32 (PyTorch NCDHW for 3D)
    weight: (O, C, 1, 1, 1) float32 (nn.Conv3d weight shape)
    bias:   (O,)            float32
    returns (N, O, D, H, W) float32
    """
    N, C, D, H, W = x.shape
    O = weight.shape[0]
    S = D * H * W

    x3 = x.reshape(N, C, S)                               # metadata-only reshape
    w_flat = weight.reshape(O * C).astype(jnp.float32)    # SMEM scalars
    b_flat = bias.reshape(O).astype(jnp.float32)          # SMEM scalars

    TS, num_s = _choose_spatial_tile(S, C, O, itemsize=x.dtype.itemsize)

    y3 = pl.pallas_call(
        functools.partial(_conv1x1_kernel, n_in=C, n_out=O),
        out_shape=jax.ShapeDtypeStruct((N, O, S), x.dtype),
        grid=(N, num_s),
        in_specs=[
            # Activation tile: batch squeezed, all channels, TS spatial lanes.
            pl.BlockSpec((None, C, TS), lambda n, s: (n, 0, s)),
            # Weights and bias: whole arrays resident in SMEM (scalar reads).
            pl.BlockSpec(memory_space=pltpu.MemorySpace.SMEM),
            pl.BlockSpec(memory_space=pltpu.MemorySpace.SMEM),
        ],
        out_specs=pl.BlockSpec((None, O, TS), lambda n, s: (n, 0, s)),
        compiler_params=pltpu.CompilerParams(
            dimension_semantics=("parallel", "parallel"),
        ),
    )(x3, w_flat, b_flat)

    return y3.reshape(N, O, D, H, W)


def init_outconv_params(key, in_ch, out_ch, dtype=jnp.float32):
    """Deterministic init matching nn.Conv3d(in_ch, out_ch, 1) parameter shapes."""
    kw, kb = jax.random.split(key)
    fan_in = in_ch * 1 * 1 * 1
    bound = 1.0 / (fan_in ** 0.5)   # PyTorch default: U(-1/sqrt(fan_in), 1/sqrt(fan_in))
    weight = jax.random.uniform(kw, (out_ch, in_ch, 1, 1, 1), dtype,
                                minval=-bound, maxval=bound)
    bias = jax.random.uniform(kb, (out_ch,), dtype, minval=-bound, maxval=bound)
    return weight, bias


if __name__ == "__main__":
    key = jax.random.PRNGKey(0)
    k_x, k_p = jax.random.split(key)

    # Small shapes consistent with a 3D UNet output head.
    N, in_ch, out_ch = 2, 4, 3
    D, H, W = 4, 8, 8

    x = jax.random.normal(k_x, (N, in_ch, D, H, W), dtype=jnp.float32)
    weight, bias = init_outconv_params(k_p, in_ch, out_ch)

    y = outconv_forward(x, weight, bias)
    y = jax.block_until_ready(y)

    # Reference check (plain JAX einsum) to validate the kernel semantics.
    y_ref = jnp.einsum("ncdhw,oc->nodhw", x, weight.reshape(out_ch, in_ch)) \
            + bias[None, :, None, None, None]
    assert y.shape == (N, out_ch, D, H, W), y.shape
    assert jnp.allclose(y, y_ref, atol=1e-5, rtol=1e-5), "mismatch vs reference"

    print("KERNEL_OK")
</pallas_src>

<mosaic_0001>
module attributes {stable_mosaic.version = 11 : i64} {
  func.func @_conv1x1_kernel(%arg0: i32, %arg1: i32, %arg2: memref<1x4x256xf32, #tpu.memory_space<vmem>>, %arg3: memref<12xf32, #tpu.memory_space<smem>>, %arg4: memref<3xf32, #tpu.memory_space<smem>>, %arg5: memref<1x3x256xf32, #tpu.memory_space<vmem>>) attributes {dimension_semantics = [#tpu.dimension_semantics<parallel>, #tpu.dimension_semantics<parallel>], iteration_bounds = array<i64: 2, 1>, scalar_prefetch = 0 : i64, scratch_operands = 0 : i64, tpu.core_type = #tpu.core_type<tc>, window_params = [{transform_indices = @transform_0, window_bounds = array<i64: 1, 4, 256>}, {transform_indices = @transform_1, window_bounds = array<i64: 12>}, {transform_indices = @transform_2, window_bounds = array<i64: 3>}, {transform_indices = @transform_3, window_bounds = array<i64: 1, 3, 256>}]} {
    %c0 = arith.constant 0 : index
    %c0_0 = arith.constant 0 : index
    %c0_1 = arith.constant 0 : index
    %0 = vector.load %arg2[%c0, %c0_0, %c0_1] : memref<1x4x256xf32, #tpu.memory_space<vmem>>, vector<1x4x256xf32>
    %1 = vector.shape_cast %0 : vector<1x4x256xf32> to vector<4x256xf32>
    %2 = vector.extract_strided_slice %1 {offsets = [0, 0], sizes = [1, 256], strides = [1, 1]} : vector<4x256xf32> to vector<1x256xf32>
    %c0_2 = arith.constant 0 : index
    %3 = memref.load %arg3[%c0_2] : memref<12xf32, #tpu.memory_space<smem>>
    %4 = vector.broadcast %3 : f32 to vector<1x256xf32>
    %5 = arith.mulf %2, %4 : vector<1x256xf32>
    %6 = vector.extract_strided_slice %1 {offsets = [1, 0], sizes = [1, 256], strides = [1, 1]} : vector<4x256xf32> to vector<1x256xf32>
    %c1 = arith.constant 1 : index
    %7 = memref.load %arg3[%c1] : memref<12xf32, #tpu.memory_space<smem>>
    %8 = vector.broadcast %7 : f32 to vector<1x256xf32>
    %9 = arith.mulf %6, %8 : vector<1x256xf32>
    %10 = arith.addf %5, %9 : vector<1x256xf32>
    %11 = vector.extract_strided_slice %1 {offsets = [2, 0], sizes = [1, 256], strides = [1, 1]} : vector<4x256xf32> to vector<1x256xf32>
    %c2 = arith.constant 2 : index
    %12 = memref.load %arg3[%c2] : memref<12xf32, #tpu.memory_space<smem>>
    %13 = vector.broadcast %12 : f32 to vector<1x256xf32>
    %14 = arith.mulf %11, %13 : vector<1x256xf32>
    %15 = arith.addf %10, %14 : vector<1x256xf32>
    %16 = vector.extract_strided_slice %1 {offsets = [3, 0], sizes = [1, 256], strides = [1, 1]} : vector<4x256xf32> to vector<1x256xf32>
    %c3 = arith.constant 3 : index
    %17 = memref.load %arg3[%c3] : memref<12xf32, #tpu.memory_space<smem>>
    %18 = vector.broadcast %17 : f32 to vector<1x256xf32>
    %19 = arith.mulf %16, %18 : vector<1x256xf32>
    %20 = arith.addf %15, %19 : vector<1x256xf32>
    %c0_3 = arith.constant 0 : index
    %21 = memref.load %arg4[%c0_3] : memref<3xf32, #tpu.memory_space<smem>>
    %22 = vector.broadcast %21 : f32 to vector<1x256xf32>
    %23 = arith.addf %20, %22 : vector<1x256xf32>
    %c0_4 = arith.constant 0 : index
    %c0_5 = arith.constant 0 : index
    %c0_6 = arith.constant 0 : index
    %24 = vector.load %arg5[%c0_4, %c0_5, %c0_6] : memref<1x3x256xf32, #tpu.memory_space<vmem>>, vector<1x1x256xf32>
    %25 = vector.shape_cast %24 : vector<1x1x256xf32> to vector<1x256xf32>
    %26 = vector.shape_cast %23 : vector<1x256xf32> to vector<1x1x256xf32>
    tpu.vector_store %arg5[%c0_4, %c0_5, %c0_6], %26 {strides = array<i32>} : memref<1x3x256xf32, #tpu.memory_space<vmem>>, vector<1x1x256xf32>,
    %27 = vector.extract_strided_slice %1 {offsets = [0, 0], sizes = [1, 256], strides = [1, 1]} : vector<4x256xf32> to vector<1x256xf32>
    %c4 = arith.constant 4 : index
    %28 = memref.load %arg3[%c4] : memref<12xf32, #tpu.memory_space<smem>>
    %29 = vector.broadcast %28 : f32 to vector<1x256xf32>
    %30 = arith.mulf %27, %29 : vector<1x256xf32>
    %31 = vector.extract_strided_slice %1 {offsets = [1, 0], sizes = [1, 256], strides = [1, 1]} : vector<4x256xf32> to vector<1x256xf32>
    %c5 = arith.constant 5 : index
    %32 = memref.load %arg3[%c5] : memref<12xf32, #tpu.memory_space<smem>>
    %33 = vector.broadcast %32 : f32 to vector<1x256xf32>
    %34 = arith.mulf %31, %33 : vector<1x256xf32>
    %35 = arith.addf %30, %34 : vector<1x256xf32>
    %36 = vector.extract_strided_slice %1 {offsets = [2, 0], sizes = [1, 256], strides = [1, 1]} : vector<4x256xf32> to vector<1x256xf32>
    %c6 = arith.constant 6 : index
    %37 = memref.load %arg3[%c6] : memref<12xf32, #tpu.memory_space<smem>>
    %38 = vector.broadcast %37 : f32 to vector<1x256xf32>
    %39 = arith.mulf %36, %38 : vector<1x256xf32>
    %40 = arith.addf %35, %39 : vector<1x256xf32>
    %41 = vector.extract_strided_slice %1 {offsets = [3, 0], sizes = [1, 256], strides = [1, 1]} : vector<4x256xf32> to vector<1x256xf32>
    %c7 = arith.constant 7 : index
    %42 = memref.load %arg3[%c7] : memref<12xf32, #tpu.memory_space<smem>>
    %43 = vector.broadcast %42 : f32 to vector<1x256xf32>
    %44 = arith.mulf %41, %43 : vector<1x256xf32>
    %45 = arith.addf %40, %44 : vector<1x256xf32>
    %c1_7 = arith.constant 1 : index
    %46 = memref.load %arg4[%c1_7] : memref<3xf32, #tpu.memory_space<smem>>
    %47 = vector.broadcast %46 : f32 to vector<1x256xf32>
    %48 = arith.addf %45, %47 : vector<1x256xf32>
    %c0_8 = arith.constant 0 : index
    %c1_9 = arith.constant 1 : index
    %c0_10 = arith.constant 0 : index
    %49 = vector.load %arg5[%c0_8, %c1_9, %c0_10] : memref<1x3x256xf32, #tpu.memory_space<vmem>>, vector<1x1x256xf32>
    %50 = vector.shape_cast %49 : vector<1x1x256xf32> to vector<1x256xf32>
    %51 = vector.shape_cast %48 : vector<1x256xf32> to vector<1x1x256xf32>
    tpu.vector_store %arg5[%c0_8, %c1_9, %c0_10], %51 {strides = array<i32>} : memref<1x3x256xf32, #tpu.memory_space<vmem>>, vector<1x1x256xf32>,
    %52 = vector.extract_strided_slice %1 {offsets = [0, 0], sizes = [1, 256], strides = [1, 1]} : vector<4x256xf32> to vector<1x256xf32>
    %c8 = arith.constant 8 : index
    %53 = memref.load %arg3[%c8] : memref<12xf32, #tpu.memory_space<smem>>
    %54 = vector.broadcast %53 : f32 to vector<1x256xf32>
    %55 = arith.mulf %52, %54 : vector<1x256xf32>
    %56 = vector.extract_strided_slice %1 {offsets = [1, 0], sizes = [1, 256], strides = [1, 1]} : vector<4x256xf32> to vector<1x256xf32>
    %c9 = arith.constant 9 : index
    %57 = memref.load %arg3[%c9] : memref<12xf32, #tpu.memory_space<smem>>
    %58 = vector.broadcast %57 : f32 to vector<1x256xf32>
    %59 = arith.mulf %56, %58 : vector<1x256xf32>
    %60 = arith.addf %55, %59 : vector<1x256xf32>
    %61 = vector.extract_strided_slice %1 {offsets = [2, 0], sizes = [1, 256], strides = [1, 1]} : vector<4x256xf32> to vector<1x256xf32>
    %c10 = arith.constant 10 : index
    %62 = memref.load %arg3[%c10] : memref<12xf32, #tpu.memory_space<smem>>
    %63 = vector.broadcast %62 : f32 to vector<1x256xf32>
    %64 = arith.mulf %61, %63 : vector<1x256xf32>
    %65 = arith.addf %60, %64 : vector<1x256xf32>
    %66 = vector.extract_strided_slice %1 {offsets = [3, 0], sizes = [1, 256], strides = [1, 1]} : vector<4x256xf32> to vector<1x256xf32>
    %c11 = arith.constant 11 : index
    %67 = memref.load %arg3[%c11] : memref<12xf32, #tpu.memory_space<smem>>
    %68 = vector.broadcast %67 : f32 to vector<1x256xf32>
    %69 = arith.mulf %66, %68 : vector<1x256xf32>
    %70 = arith.addf %65, %69 : vector<1x256xf32>
    %c2_11 = arith.constant 2 : index
    %71 = memref.load %arg4[%c2_11] : memref<3xf32, #tpu.memory_space<smem>>
    %72 = vector.broadcast %71 : f32 to vector<1x256xf32>
    %73 = arith.addf %70, %72 : vector<1x256xf32>
    %c0_12 = arith.constant 0 : index
    %c2_13 = arith.constant 2 : index
    %c0_14 = arith.constant 0 : index
    %74 = vector.load %arg5[%c0_12, %c2_13, %c0_14] : memref<1x3x256xf32, #tpu.memory_space<vmem>>, vector<1x1x256xf32>
    %75 = vector.shape_cast %74 : vector<1x1x256xf32> to vector<1x256xf32>
    %76 = vector.shape_cast %73 : vector<1x256xf32> to vector<1x1x256xf32>
    tpu.vector_store %arg5[%c0_12, %c2_13, %c0_14], %76 {strides = array<i32>} : memref<1x3x256xf32, #tpu.memory_space<vmem>>, vector<1x1x256xf32>,
    return
  }
  func.func @transform_0(%arg0: i32, %arg1: i32) -> (i32, i32, i32) {
    %c0_i32 = arith.constant 0 : i32
    %c0_i32_0 = arith.constant 0 : i32
    return %arg0, %c0_i32, %arg1 : i32, i32, i32
  }
  func.func @transform_1(%arg0: i32, %arg1: i32) -> i32 {
    %c0_i32 = arith.constant 0 : i32
    %c0_i32_0 = arith.constant 0 : i32
    return %c0_i32 : i32
  }
  func.func @transform_2(%arg0: i32, %arg1: i32) -> i32 {
    %c0_i32 = arith.constant 0 : i32
    %c0_i32_0 = arith.constant 0 : i32
    return %c0_i32 : i32
  }
  func.func @transform_3(%arg0: i32, %arg1: i32) -> (i32, i32, i32) {
    %c0_i32 = arith.constant 0 : i32
    %c0_i32_0 = arith.constant 0 : i32
    return %arg0, %c0_i32, %arg1 : i32, i32, i32
  }
}

</mosaic_0001>

<llo_original>
// kernel: outconv_forward.1
$region0: #{outconv_forward.1}
  #allocation0 [shape = 'u32[]', space=smem, size = 0x4, offset = 0x4, fixed_abs, tag = 'smem constant byte address 0x4 - core index']
  #allocation1 [shape = 'u32[144,128]{1,0:T(1,128)}', space=vmem, size = 0x12000, scoped, tag = 'internal scratch']
  %s0 = inlined_call_operand.vmem [shape: f32[2,4,256], index: 0, kind: input, shape index: {}]
  %s1 = inlined_call_operand.vmem [shape: f32[12], index: 1, kind: input, shape index: {}]
  %s2 = inlined_call_operand.vmem [shape: f32[3], index: 2, kind: input, shape index: {}]
  %s3 = inlined_call_operand.vmem [shape: f32[2,3,256], index: 3, kind: output, shape index: {}]
  %s4 = sld [smem:[#allocation0]]
  $region53: #{outconv_forward.1} parent=0
    _
  %s6 = ssub.s32 1, %s4
  %s7 = scalar_select 0, %s6, %s4
  $region1: #{outconv_forward.1} parent=0
    #allocation2 [shape = 'u8[512]{0}', space=smem, size = 0x200, scoped, tag = 'input window, operand 1, single buffered']
    #allocation3 [shape = 's32[2]{0}', space=sflag, size = 0x8, scoped, tag = 'scoped memory for outconv_forward.1']
    #allocation4 [shape = 'u8[512]{0}', space=smem, size = 0x200, scoped, tag = 'input window, operand 2, single buffered']
    #allocation5 [shape = 's32[1]{0}', space=sflag, size = 0x4, scoped, tag = 'scoped memory for outconv_forward.1']
    %8 = vsyncpa [#allocation3], 0
    %9 = vsyncpa [#allocation5], 0
    loop: start=0, step=1, limit=4
    $region2: #{outconv_forward.1} parent=1 // loop_pre_header
      _
    $region3: #{outconv_forward.1} parent=1 // loop_header
      %s11 = sphi 0, %s15
      %p12 = scmp.ge.s32.totalorder %s11, 4
      %s18 = sphi 0, %s30
      %s19 = sphi 0, %s26
      %s20 = sphi 0, %s18
      %s21 = sphi 0, %s19
      %s22 = sphi 0, %s20
      %s23 = sphi 0, %s21
      %s35 = sphi 0, %s37
      %s38 = sphi 0, %s35
      %s39 = sphi 0, %s38
      %s55 = sphi 0, %s39
      %s59 = sphi 0, %s59
      %s61 = sphi 0, %s59
      %s62 = sphi 0, %s61
      %s76 = sphi 0, %s62
      %s80 = sphi 0, %s80
      %s82 = sphi 0, %s80
      %s83 = sphi 0, %s82
      %s97 = sphi 0, %s83
      %s105 = sphi 0, %s107
      %s108 = sphi 0, %s105
      %s109 = sphi 0, %s108
      %s125 = sphi 0, %s109
    $region4: #{outconv_forward.1} parent=1 // loop_header_branch
      %14 = sbr.rel (%p12) target = $region8
    $region5: #{outconv_forward.1} parent=1 // loop_body
      %s16 = ssub.s32 %s11, 1
      %s17 = ssub.s32 %s11, 2
      %s24 = sadd.s32 1, %s19
      %p25 = scmp.ge.s32.totalorder %s24, 1
      %s26 = scalar_select %p25, 0, %s24
      %s27 = sadd.s32 1, %s18
      %s28 = scalar_select %p25, %s27, %s18
      %p29 = scmp.ge.s32.totalorder %s28, 2
      %s30 = scalar_select %p29, 0, %s28
      %s31 = ssub.s32 %s18, %s30
      %s32 = ssub.s32 %s19, %s26
      %s33 = sor.u32 %s31, %s32
      %p34 = scmp.eq.s32.totalorder %s33, 0
      %s36 = sadd.s32 %s35, 1
      %s37 = scalar_select %p34, %s35, %s36
      %p40 = pneg %p34
      %p41 = scmp.eq.s32.totalorder %s11, 1
      %p42 = por %p40, %p41
      %p43 = scmp.ne.s32.totalorder %s35, %s38
      %p44 = scmp.eq.s32.totalorder %s11, 0
      %p45 = por %p43, %p44
      %p46 = scmp.ne.s32.totalorder %s35, %s38
      %p47 = scmp.eq.s32.totalorder %s16, 1
      %p48 = por %p46, %p47
      %p49 = scmp.ne.s32.totalorder %s38, %s39
      %p50 = scmp.eq.s32.totalorder %s16, 0
      %p51 = por %p49, %p50
      %p52 = scmp.ne.s32.totalorder %s38, %s39
      %p53 = scmp.eq.s32.totalorder %s17, 1
      %p54 = por %p52, %p53
      %p56 = scmp.ne.s32.totalorder %s39, %s55
      %p57 = scmp.eq.s32.totalorder %s17, 0
      %p58 = por %p56, %p57
      %s60 = sadd.s32 %s59, 1
      %p63 = scmp.eq.s32.totalorder %s11, 1
      %p64 = scmp.ne.s32.totalorder %s59, %s61
      %p65 = scmp.eq.s32.totalorder %s11, 0
      %p66 = por %p64, %p65
      %p67 = scmp.ne.s32.totalorder %s59, %s61
      %p68 = scmp.eq.s32.totalorder %s16, 1
      %p69 = por %p67, %p68
      %p70 = scmp.ne.s32.totalorder %s61, %s62
      %p71 = scmp.eq.s32.totalorder %s16, 0
      %p72 = por %p70, %p71
      %p73 = scmp.ne.s32.totalorder %s61, %s62
      %p74 = scmp.eq.s32.totalorder %s17, 1
      %p75 = por %p73, %p74
      %p77 = scmp.ne.s32.totalorder %s62, %s76
      %p78 = scmp.eq.s32.totalorder %s17, 0
      %p79 = por %p77, %p78
      %s81 = sadd.s32 %s80, 1
      %p84 = scmp.eq.s32.totalorder %s11, 1
      %p85 = scmp.ne.s32.totalorder %s80, %s82
      %p86 = scmp.eq.s32.totalorder %s11, 0
      %p87 = por %p85, %p86
      %p88 = scmp.ne.s32.totalorder %s80, %s82
      %p89 = scmp.eq.s32.totalorder %s16, 1
      %p90 = por %p88, %p89
      %p91 = scmp.ne.s32.totalorder %s82, %s83
      %p92 = scmp.eq.s32.totalorder %s16, 0
      %p93 = por %p91, %p92
      %p94 = scmp.ne.s32.totalorder %s82, %s83
      %p95 = scmp.eq.s32.totalorder %s17, 1
      %p96 = por %p94, %p95
      %p98 = scmp.ne.s32.totalorder %s83, %s97
      %p99 = scmp.eq.s32.totalorder %s17, 0
      %p100 = por %p98, %p99
      %s101 = ssub.s32 %s18, %s30
      %s102 = ssub.s32 %s19, %s26
      %s103 = sor.u32 %s101, %s102
      %p104 = scmp.eq.s32.totalorder %s103, 0
      %s106 = sadd.s32 %s105, 1
      %s107 = scalar_select %p104, %s105, %s106
      %p110 = pneg %p104
      %p111 = scmp.eq.s32.totalorder %s11, 1
      %p112 = por %p110, %p111
      %p113 = scmp.ne.s32.totalorder %s105, %s108
      %p114 = scmp.eq.s32.totalorder %s11, 0
      %p115 = por %p113, %p114
      %p116 = scmp.ne.s32.totalorder %s105, %s108
      %p117 = scmp.eq.s32.totalorder %s16, 1
      %p118 = por %p116, %p117
      %p119 = scmp.ne.s32.totalorder %s108, %s109
      %p120 = scmp.eq.s32.totalorder %s16, 0
      %p121 = por %p119, %p120
      %p122 = scmp.ne.s32.totalorder %s108, %s109
      %p123 = scmp.eq.s32.totalorder %s17, 1
      %p124 = por %p122, %p123
      %p126 = scmp.ne.s32.totalorder %s109, %s125
      %p127 = scmp.eq.s32.totalorder %s17, 0
      %p128 = por %p126, %p127
      %p129 = scmp.le.s32.totalorder 1, %s11
      %p130 = scmp.lt.s32.totalorder %s11, 3
      %p131 = pnand %p129, %p130
      %p132 = pneg %p131
      // Predicated region
      $region9: #{outconv_forward.1} parent=5 // pred_check
        _
      $region10: #{outconv_forward.1} parent=5 // pred_check_branch
        %134 = sbr.rel (%p131) target = $region12
      $region11: #{outconv_forward.1} parent=5 // pred_region
        %s135 = ssub.s32 %s11, 1
        // Predicated region
        $region13: #{outconv_forward.1} parent=11 // pred_check
          %p136 = pneg %p72
        $region14: #{outconv_forward.1} parent=11 // pred_check_branch
          %138 = sbr.rel (%p136) target = $region16
        $region15: #{outconv_forward.1} parent=11 // pred_region
          %s140 = ssub.s32 16, 16
          %141 = vsyncadd [#allocation3], %s140
          %s143 = sshll.u32 %s1, 4
          %s144 = int_to_ptr.vmem [resolvable:$true] %s143
          %146 = dma.vmem_to_smem %s144, 16, [#allocation2], [#allocation3]
        $region16: #{outconv_forward.1} parent=11 // pred_fallthru
          _
        // Predicated region
        $region17: #{outconv_forward.1} parent=11 // pred_check
          %p147 = pneg %p93
        $region18: #{outconv_forward.1} parent=11 // pred_check_branch
          %149 = sbr.rel (%p147) target = $region20
        $region19: #{outconv_forward.1} parent=11 // pred_region
          %s151 = ssub.s32 16, 16
          %152 = vsyncadd [#allocation5], %s151
          %s154 = sshll.u32 %s2, 4
          %s155 = int_to_ptr.vmem [resolvable:$true] %s154
          %157 = dma.vmem_to_smem %s155, 16, [#allocation4], [#allocation5]
        $region20: #{outconv_forward.1} parent=11 // pred_fallthru
          _
      $region12: #{outconv_forward.1} parent=5 // pred_fallthru
        _
      %p158 = scmp.lt.s32.totalorder %s11, 2
      // Predicated region
      $region21: #{outconv_forward.1} parent=5 // pred_check
        %p159 = pneg %p158
      $region22: #{outconv_forward.1} parent=5 // pred_check_branch
        %161 = sbr.rel (%p159) target = $region24
      $region23: #{outconv_forward.1} parent=5 // pred_region
        // Predicated region
        $region25: #{outconv_forward.1} parent=23 // pred_check
          %p162 = pneg %p45
        $region26: #{outconv_forward.1} parent=23 // pred_check_branch
          %164 = sbr.rel (%p162) target = $region28
        $region27: #{outconv_forward.1} parent=23 // pred_region
          %s165 = smul.u32 2, %s19
          %p166 = scmp.lt.s32.totalorder %s18, 1
          %s167 = scalar_select %p166, %s18, 1
          %p168 = scmp.lt.s32.totalorder %s165, 1
          %s169 = scalar_select %p168, %s165, 1
          %s170 = smul.addr %s167, 2
          %s171 = sadd.s32 %s169, %s170
          %s172 = smul.addr %s171, 4
          %s173 = scalar_lea.vmem %s0, %s172
          %s174 = smul.u32 2, %s19
        $region28: #{outconv_forward.1} parent=23 // pred_fallthru
          _
      $region24: #{outconv_forward.1} parent=5 // pred_fallthru
        _
      %p175 = scmp.le.s32.totalorder 1, %s11
      %p176 = scmp.lt.s32.totalorder %s11, 3
      %p177 = pnand %p175, %p176
      %p178 = pneg %p177
      // Predicated region
      $region29: #{outconv_forward.1} parent=5 // pred_check
        _
      $region30: #{outconv_forward.1} parent=5 // pred_check_branch
        %180 = sbr.rel (%p177) target = $region32
      $region31: #{outconv_forward.1} parent=5 // pred_region
        %s181 = ssub.s32 %s11, 1
        // Predicated region
        $region33: #{outconv_forward.1} parent=31 // pred_check
          %p182 = pneg %p72
        $region34: #{outconv_forward.1} parent=31 // pred_check_branch
          %184 = sbr.rel (%p182) target = $region36
        $region35: #{outconv_forward.1} parent=31 // pred_region
          %185 = dma.done [#allocation3], 16
        $region36: #{outconv_forward.1} parent=31 // pred_fallthru
          _
        // Predicated region
        $region37: #{outconv_forward.1} parent=31 // pred_check
          %p186 = pneg %p93
        $region38: #{outconv_forward.1} parent=31 // pred_check_branch
          %188 = sbr.rel (%p186) target = $region40
        $region39: #{outconv_forward.1} parent=31 // pred_region
          %189 = dma.done [#allocation5], 16
        $region40: #{outconv_forward.1} parent=31 // pred_fallthru
          _
        %190 = sfence
        %s191 = smul.u32 2, %s21
        %p192 = scmp.lt.s32.totalorder %s20, 1
        %s193 = scalar_select %p192, %s20, 1
        %p194 = scmp.lt.s32.totalorder %s191, 1
        %s195 = scalar_select %p194, %s191, 1
        %s196 = smul.addr %s193, 2
        %s197 = sadd.s32 %s195, %s196
        %s198 = smul.addr %s197, 4
        %s199 = scalar_lea.vmem %s0, %s198
        %p200 = pneg %p51
        %p201 = pneg %p48
        %p202 = pneg %p72
        %p203 = pneg %p69
        %p204 = pneg %p93
        %p205 = pneg %p90
        %p206 = pneg %p121
        %p207 = pneg %p118
        %s208 = smul.u32 2, %s21
        %p209 = scmp.lt.s32.totalorder %s20, 1
        %s210 = scalar_select %p209, %s20, 1
        %p211 = scmp.lt.s32.totalorder %s208, 1
        %s212 = scalar_select %p211, %s208, 1
        %s213 = smul.addr %s210, 2
        %s214 = sadd.s32 %s212, %s213
        %s215 = smul.addr %s214, 4
        %s216 = scalar_lea.vmem %s3, %s215
        %s217 = smul.u32 2, %s21
        %p218 = scmp.lt.s32.totalorder %s20, 1
        %s219 = scalar_select %p218, %s20, 1
        %p220 = scmp.lt.s32.totalorder %s217, 1
        %s221 = scalar_select %p220, %s217, 1
        %s222 = smul.addr %s219, 2
        %s223 = sadd.s32 %s221, %s222
        %s224 = smul.addr %s223, 4
        %s225 = scalar_lea.vmem %s0, %s224
        %s226 = smul.u32 2, %s21
        %s227 = smul.u32 2, %s21
        %p228 = scmp.lt.s32.totalorder %s20, 1
        %s229 = scalar_select %p228, %s20, 1
        %p230 = scmp.lt.s32.totalorder %s227, 1
        %s231 = scalar_select %p230, %s227, 1
        %s232 = smul.addr %s229, 2
        %s233 = sadd.s32 %s231, %s232
        %s234 = smul.addr %s233, 4
        %s235 = scalar_lea.vmem %s3, %s234
        %s236 = smul.u32 2, %s21
        %v237 = vld [vmem:[%s225] sm:$0xff]
        %s238 = sld [smem:[#allocation2]]
        %v239 = vstv %s238
        %v240 = vmul.f32 %v237, %v239
        %s241 = sld [smem:[#allocation2 + $0x1]]
        %v242 = vstv %s241
        %v243 = vmul.f32 %v237, %v242
        %v245 = vrot.slane %v243, 5
        %v246 = vrot.slane %v245, 4
        %v248 = vadd.f32 %v240, %v246
        %s249 = sld [smem:[#allocation2 + $0x2]]
        %v250 = vstv %s249
        %v251 = vmul.f32 %v237, %v250
        %v253 = vrot.slane %v251, 6
        %v254 = vrot.slane %v253, 4
        %v256 = vadd.f32 %v248, %v254
        %s257 = sld [smem:[#allocation2 + $0x3]]
        %v258 = vstv %s257
        %v259 = vmul.f32 %v237, %v258
        %v261 = vrot.slane %v259, 7
        %v262 = vrot.slane %v261, 4
        %v264 = vadd.f32 %v256, %v262
        %s265 = sld [smem:[#allocation4]]
        %v266 = vstv %s265
        %v267 = vadd.f32 %v264, %v266
        %v270 = vunpack.c.l.s4 1966171168
        %v271 = vunpack.c.0.s8 %v270
        %v272 = vlaneseq
        %v273 = vshrl.u32 %v272, 7
        %v274 = vsub.s32 %v271, %v273
        %v275 = vrot.slane %v267, %v274
        %v277 = vunpack.c.l.s4 1966171168
        %v278 = vunpack.c.0.s8 %v277
        %v279 = vlaneseq
        %v280 = vshrl.u32 %v279, 7
        %v281 = vsub.s32 %v278, %v280
        %v282 = vrot.slane %v275, %v281
        %v284 = vlaneseq
        %vm285 = vcmp.ge.s32.totalorder %v284, 0
        %vm286 = vcmp.lt.s32.totalorder %v284, 256
        %vm287 = vmand %vm285, %vm286
        %288 = vst.msk [vmem:[%s235] ss:$4 sm:$0x3] %vm287, %v282
        %s289 = sld [smem:[#allocation2 + $0x4]]
        %v290 = vstv %s289
        %v291 = vmul.f32 %v237, %v290
        %s292 = sld [smem:[#allocation2 + $0x5]]
        %v293 = vstv %s292
        %v294 = vmul.f32 %v237, %v293
        %v296 = vrot.slane %v294, 5
        %v297 = vrot.slane %v296, 4
        %v299 = vadd.f32 %v291, %v297
        %s300 = sld [smem:[#allocation2 + $0x6]]
        %v301 = vstv %s300
        %v302 = vmul.f32 %v237, %v301
        %v304 = vrot.slane %v302, 6
        %v305 = vrot.slane %v304, 4
        %v307 = vadd.f32 %v299, %v305
        %s308 = sld [smem:[#allocation2 + $0x7]]
        %v309 = vstv %s308
        %v310 = vmul.f32 %v237, %v309
        %v312 = vrot.slane %v310, 7
        %v313 = vrot.slane %v312, 4
        %v315 = vadd.f32 %v307, %v313
        %s316 = sld [smem:[#allocation4 + $0x1]]
        %v317 = vstv %s316
        %v318 = vadd.f32 %v315, %v317
        %v321 = vunpack.c.l.s4 1966171168
        %v322 = vunpack.c.0.s8 %v321
        %v323 = vlaneseq
        %v324 = vshrl.u32 %v323, 7
        %v325 = vsub.s32 %v322, %v324
        %v326 = vrot.slane %v318, %v325
        %v328 = vunpack.c.l.s4 1966171168
        %v329 = vunpack.c.0.s8 %v328
        %v330 = vlaneseq
        %v331 = vshrl.u32 %v330, 7
        %v332 = vsub.s32 %v329, %v331
        %v333 = vrot.slane %v326, %v332
        %s335 = scalar_lea.vmem %s235, 1
        %336 = vst.msk [vmem:[%s335] ss:$4 sm:$0x3] %vm287, %v333
        %s337 = sld [smem:[#allocation2 + $0x8]]
        %v338 = vstv %s337
        %v339 = vmul.f32 %v237, %v338
        %s340 = sld [smem:[#allocation2 + $0x9]]
        %v341 = vstv %s340
        %v342 = vmul.f32 %v237, %v341
        %v344 = vrot.slane %v342, 5
        %v345 = vrot.slane %v344, 4
        %v347 = vadd.f32 %v339, %v345
        %s348 = sld [smem:[#allocation2 + $0xa]]
        %v349 = vstv %s348
        %v350 = vmul.f32 %v237, %v349
        %v352 = vrot.slane %v350, 6
        %v353 = vrot.slane %v352, 4
        %v355 = vadd.f32 %v347, %v353
        %s356 = sld [smem:[#allocation2 + $0xb]]
        %v357 = vstv %s356
        %v358 = vmul.f32 %v237, %v357
        %v360 = vrot.slane %v358, 7
        %v361 = vrot.slane %v360, 4
        %v363 = vadd.f32 %v355, %v361
        %s364 = sld [smem:[#allocation4 + $0x2]]
        %v365 = vstv %s364
        %v366 = vadd.f32 %v363, %v365
        %v369 = vunpack.c.l.s4 1966171168
        %v370 = vunpack.c.0.s8 %v369
        %v371 = vlaneseq
        %v372 = vshrl.u32 %v371, 7
        %v373 = vsub.s32 %v370, %v372
        %v374 = vrot.slane %v366, %v373
        %v376 = vunpack.c.l.s4 1966171168
        %v377 = vunpack.c.0.s8 %v376
        %v378 = vlaneseq
        %v379 = vshrl.u32 %v378, 7
        %v380 = vsub.s32 %v377, %v379
        %v381 = vrot.slane %v374, %v380
        %s383 = scalar_lea.vmem %s235, 2
        %384 = vst.msk [vmem:[%s383] ss:$4 sm:$0x3] %vm287, %v381
        %s385 = smul.u32 2, %s21
        %p386 = scmp.lt.s32.totalorder %s20, 1
        %s387 = scalar_select %p386, %s20, 1
        %p388 = scmp.lt.s32.totalorder %s385, 1
        %s389 = scalar_select %p388, %s385, 1
        %s390 = smul.addr %s387, 2
        %s391 = sadd.s32 %s389, %s390
        %s392 = smul.addr %s391, 4
        %s393 = scalar_lea.vmem %s3, %s392
        // Predicated region
        $region41: #{outconv_forward.1} parent=31 // pred_check
          %p394 = pneg %p118
        $region42: #{outconv_forward.1} parent=31 // pred_check_branch
          %396 = sbr.rel (%p394) target = $region44
        $region43: #{outconv_forward.1} parent=31 // pred_region
          %s397 = smul.u32 2, %s21
        $region44: #{outconv_forward.1} parent=31 // pred_fallthru
          _
      $region32: #{outconv_forward.1} parent=5 // pred_fallthru
        _
      %p398 = scmp.le.s32.totalorder 2, %s11
      // Predicated region
      $region45: #{outconv_forward.1} parent=5 // pred_check
        %p399 = pneg %p398
      $region46: #{outconv_forward.1} parent=5 // pred_check_branch
        %401 = sbr.rel (%p399) target = $region48
      $region47: #{outconv_forward.1} parent=5 // pred_region
        %s402 = ssub.s32 %s11, 2
        // Predicated region
        $region49: #{outconv_forward.1} parent=47 // pred_check
          %p403 = pneg %p124
        $region50: #{outconv_forward.1} parent=47 // pred_check_branch
          %405 = sbr.rel (%p403) target = $region52
        $region51: #{outconv_forward.1} parent=47 // pred_region
          %s406 = smul.u32 2, %s23
          %p407 = scmp.lt.s32.totalorder %s22, 1
          %s408 = scalar_select %p407, %s22, 1
          %p409 = scmp.lt.s32.totalorder %s406, 1
          %s410 = scalar_select %p409, %s406, 1
          %s411 = smul.addr %s408, 2
          %s412 = sadd.s32 %s410, %s411
          %s413 = smul.addr %s412, 4
          %s414 = scalar_lea.vmem %s3, %s413
        $region52: #{outconv_forward.1} parent=47 // pred_fallthru
          _
      $region48: #{outconv_forward.1} parent=5 // pred_fallthru
        _
    $region6: #{outconv_forward.1} parent=1 // loop_footer
      %s15 = sadd.s32 1, %s11
    $region7: #{outconv_forward.1} parent=1 // loop_footer_branch
      %10 = sbr.rel target = $region3
    $region8: #{outconv_forward.1} parent=1 // loop_exit
      _
    %415 = vsyncpa [#allocation3], 1
    %s416 = scalar_lea.sflag [#allocation3], 1
    %417 = vsyncpa %s416, 1
    %418 = vsyncpa [#allocation5], 1

</llo_original>
